<compile_context>
chip_gen: v5e
topology: v5e:2x2
jax: 0.10.0
libtpu: 0.0.40
codegen_flags: <defaults>
</compile_context>

<pallas_src>
import jax
import jax.numpy as jnp
from jax.experimental import pallas as pl
from jax.experimental.pallas import tpu as pltpu


def _round_up(a: int, b: int) -> int:
    return ((a + b - 1) // b) * b


def _saliency_kernel(x_ref, w2_ref, b_ref, o_ref):
    # x_ref:  (TM2, 2K)  two tokens per row (token 2r in lanes [0,K), 2r+1 in [K,2K))
    # w2_ref: (2K, 2)    resident: column 0 = [w; 0], column 1 = [0; w]
    # b_ref:  (1,)       bias scalar in SMEM
    # o_ref:  (TM2, 2)   sigmoid(logit) for (even token, odd token)
    logits = jnp.dot(x_ref[...], w2_ref[...],
                     preferred_element_type=jnp.float32) + b_ref[0]
    # sigmoid via EUP exp + EUP approximate reciprocal (VPU stays free).
    att = pl.reciprocal(1.0 + jnp.exp(-logits), approx=True)
    o_ref[...] = att.astype(o_ref.dtype)


def _vmem_capacity_bytes() -> int:
    # Conservative (v7x-safe) fallback if the trace-time query is unavailable.
    try:
        info = pltpu.get_tpu_info()
        cap = getattr(info, "vmem_capacity_bytes", None)
        if cap:
            return int(cap)
    except Exception:
        pass
    return 64 * 1024 * 1024


def saliency_evaluater_forward(x, weight, bias, *, max_rows_per_tile=16384):
    """
    x:      (batch, seq, weight_size)
    weight: (1, weight_size)   (nn.Linear(weight_size, 1).weight)
    bias:   (1,)               (nn.Linear(weight_size, 1).bias)
    returns (batch, seq), same dtype as x
    """
    B, S, K = x.shape
    M = B * S
    itemsize = jnp.dtype(x.dtype).itemsize
    sublane = max(8, 32 // itemsize)          # 8 f32 / 16 bf16 / 32 int8-fp8

    # ---- Pack two tokens per row: (M, K) -> (M2, 2K) (free row-major reshape).
    x2 = x.reshape(M, K)
    if M % 2 == 1:
        # Rare (batch*seq odd): pad one zero token so rows pack 2-wide.
        # TODO(synk): handle the single odd token outside the kernel to avoid this copy.
        x2 = jnp.pad(x2, ((0, 1), (0, 0)))
    M2 = x2.shape[0] // 2
    xp = x2.reshape(M2, 2 * K)

    # ---- Resident (2K, 2) weight: col 0 = [w; 0], col 1 = [0; w].
    w = weight.reshape(K).astype(x.dtype)
    zeros = jnp.zeros((K,), dtype=x.dtype)
    w2 = jnp.stack([jnp.concatenate([w, zeros]),
                    jnp.concatenate([zeros, w])], axis=1)        # (2K, 2)
    b_sc = bias.reshape(1).astype(jnp.float32)

    # ---- Tile sizing from a per-generation VMEM budget.
    # Per packed row: double-buffered x block + double-buffered lane-padded
    # (TM2, 128) output block (the (TM2, 2) block is lane-padded in VMEM).
    out_itemsize = itemsize
    row_bytes = 2 * (2 * K * itemsize) + 2 * (128 * max(out_itemsize, 4))
    vmem_cap = _vmem_capacity_bytes()
    budget = min(int(vmem_cap * 0.4), 48 * 1024 * 1024)
    cap_rows = max(sublane, (budget // row_bytes) // sublane * sublane)
    # Ensure >= 2 grid steps for large inputs so v7x megacore can shard the grid.
    half_rows = _round_up(pl.cdiv(M2, 2), sublane)
    TM2 = max(sublane, min(max_rows_per_tile, cap_rows, half_rows))
    grid = (pl.cdiv(M2, TM2),)

    buf_bytes = TM2 * row_bytes
    vmem_limit = int(min(max(buf_bytes + (16 << 20), 32 << 20),
                         vmem_cap - (8 << 20)))

    cost = pl.CostEstimate(
        flops=2 * M * K,
        transcendentals=2 * M,                      # exp + reciprocal per token
        bytes_accessed=M * K * itemsize + M * out_itemsize + 2 * K * 2 * itemsize,
    )

    out2 = pl.pallas_call(
        _saliency_kernel,
        out_shape=jax.ShapeDtypeStruct((M2, 2), x.dtype),
        grid_spec=pl.GridSpec(
            grid=grid,
            in_specs=[
                pl.BlockSpec((TM2, 2 * K), lambda i: (i, 0)),        # x tile (pipelined)
                pl.BlockSpec((2 * K, 2), lambda i: (0, 0)),          # W2 (resident)
                pl.BlockSpec(memory_space=pltpu.MemorySpace.SMEM),   # bias scalar
            ],
            out_specs=pl.BlockSpec((TM2, 2), lambda i: (i, 0)),
        ),
        compiler_params=pltpu.CompilerParams(
            dimension_semantics=("parallel",),      # megacore sharding on v7x
            vmem_limit_bytes=vmem_limit,
        ),
        cost_estimate=cost,
    )(xp, w2, b_sc)

    # (M2, 2) -> flat tokens (row-major interleave restores token order)
    # -> drop odd-M padding -> (B, S)
    return out2.reshape(2 * M2)[:M].reshape(B, S)


if __name__ == "__main__":
    # Module config: hidden_size=32, bidirectional=True -> weight_size = 64
    hidden_size = 32
    weight_size = hidden_size * 2
    batch, seq = 2, 8

    key = jax.random.PRNGKey(0)
    kx, kw, kb = jax.random.split(key, 3)

    x = jax.random.normal(kx, (batch, seq, weight_size), dtype=jnp.float32)

    # PyTorch-style Linear init: uniform(-1/sqrt(K), 1/sqrt(K))
    bound = 1.0 / jnp.sqrt(jnp.float32(weight_size))
    weight = jax.random.uniform(kw, (1, weight_size), jnp.float32, -bound, bound)
    bias = jax.random.uniform(kb, (1,), jnp.float32, -bound, bound)

    out = saliency_evaluater_forward(x, weight, bias)
    out = jax.block_until_ready(out)

    # Plain-JAX reference with the same semantics as the PyTorch module.
    logits_ref = jnp.sum(x * weight.reshape(1, 1, weight_size), axis=-1) + bias[0]
    ref = jax.nn.sigmoid(logits_ref)

    assert out.shape == (batch, seq)
    # Tolerance accounts for the approximate EUP reciprocal in the sigmoid
    # (review item: approx=True); layout/weight bugs would show errors >> 1e-2.
    max_err = float(jnp.max(jnp.abs(out - ref)))
    assert max_err < 1e-2, f"max abs err {max_err}"

    print("KERNEL_OK")
</pallas_src>

<mosaic_0001>
module attributes {stable_mosaic.version = 11 : i64} {
  func.func @_saliency_kernel(%arg0: i32, %arg1: memref<8x128xf32, #tpu.memory_space<vmem>>, %arg2: memref<128x2xf32, #tpu.memory_space<vmem>>, %arg3: memref<1xf32, #tpu.memory_space<smem>>, %arg4: memref<8x2xf32, #tpu.memory_space<vmem>>) attributes {dimension_semantics = [#tpu.dimension_semantics<parallel>], iteration_bounds = array<i64: 1>, scalar_prefetch = 0 : i64, scratch_operands = 0 : i64, tpu.core_type = #tpu.core_type<tc>, window_params = [{transform_indices = @transform_0, window_bounds = array<i64: 8, 128>}, {pipeline_mode = #tpu.pipeline_mode<synchronous>, transform_indices = @transform_1, window_bounds = array<i64: 128, 2>}, {transform_indices = @transform_2, window_bounds = array<i64: 1>}, {transform_indices = @transform_3, window_bounds = array<i64: 8, 2>}]} {
    %c0 = arith.constant 0 : index
    %c0_0 = arith.constant 0 : index
    %0 = vector.load %arg1[%c0, %c0_0] : memref<8x128xf32, #tpu.memory_space<vmem>>, vector<8x128xf32>
    %c0_1 = arith.constant 0 : index
    %c0_2 = arith.constant 0 : index
    %1 = vector.load %arg2[%c0_1, %c0_2] : memref<128x2xf32, #tpu.memory_space<vmem>>, vector<128x2xf32>
    %cst = arith.constant dense<0.000000e+00> : vector<8x2xf32>
    %2 = tpu.matmul %0, %1, %cst {dimension_numbers = #tpu.dot_dimension_numbers<[1], [0], [0], [1], [0, 0, 1, 1], [], []>} : vector<8x128xf32>, vector<128x2xf32>, vector<8x2xf32> -> vector<8x2xf32>
    %c0_3 = arith.constant 0 : index
    %3 = memref.load %arg3[%c0_3] : memref<1xf32, #tpu.memory_space<smem>>
    %4 = vector.broadcast %3 : f32 to vector<8x2xf32>
    %5 = arith.addf %2, %4 : vector<8x2xf32>
    %cst_4 = arith.constant 0.000000e+00 : f32
    %6 = vector.broadcast %cst_4 : f32 to vector<8x2xf32>
    %7 = arith.subf %6, %5 : vector<8x2xf32>
    %8 = math.exp %7 : vector<8x2xf32>
    %cst_5 = arith.constant 1.000000e+00 : f32
    %9 = vector.broadcast %cst_5 : f32 to vector<8x2xf32>
    %10 = arith.addf %9, %8 : vector<8x2xf32>
    %11 = tpu.reciprocal %10 {approx = true} : vector<8x2xf32> -> vector<8x2xf32>
    %c0_6 = arith.constant 0 : index
    %c0_7 = arith.constant 0 : index
    %12 = vector.load %arg4[%c0_6, %c0_7] : memref<8x2xf32, #tpu.memory_space<vmem>>, vector<8x2xf32>
    tpu.vector_store %arg4[%c0_6, %c0_7], %11 {strides = array<i32>} : memref<8x2xf32, #tpu.memory_space<vmem>>, vector<8x2xf32>,
    return
  }
  func.func @transform_0(%arg0: i32) -> (i32, i32) {
    %c0_i32 = arith.constant 0 : i32
    %c0_i32_0 = arith.constant 0 : i32
    return %arg0, %c0_i32 : i32, i32
  }
  func.func @transform_1(%arg0: i32) -> (i32, i32) {
    %c0_i32 = arith.constant 0 : i32
    %c0_i32_0 = arith.constant 0 : i32
    %c0_i32_1 = arith.constant 0 : i32
    return %c0_i32, %c0_i32_0 : i32, i32
  }
  func.func @transform_2(%arg0: i32) -> i32 {
    %c0_i32 = arith.constant 0 : i32
    %c0_i32_0 = arith.constant 0 : i32
    return %c0_i32 : i32
  }
  func.func @transform_3(%arg0: i32) -> (i32, i32) {
    %c0_i32 = arith.constant 0 : i32
    %c0_i32_0 = arith.constant 0 : i32
    return %arg0, %c0_i32 : i32, i32
  }
}

</mosaic_0001>

<llo_original>
// kernel: tpu_custom_call.1
$region0: #{tpu_custom_call.1}
  #allocation0 [shape = 'u32[]', space=smem, size = 0x4, offset = 0x4, fixed_abs, tag = 'smem constant byte address 0x4 - core index']
  #allocation1 [shape = 'u32[72,128]{1,0:T(1,128)}', space=vmem, size = 0x9000, scoped, tag = 'internal scratch']
  #allocation2 [shape = 'f32[1]{0:T(128)S(6)}', space=smem, size = 0x200, scoped, tag = 'scoped memory for tpu_custom_call.1']
  %s0 = inlined_call_operand.vmem [shape: f32[8,128], index: 0, kind: input, shape index: {}]
  %s1 = inlined_call_operand.vmem [shape: f32[128,2], index: 1, kind: input, shape index: {}]
  %s2 = inlined_call_operand.<no memory space> [shape: f32[1], index: 2, kind: input, shape index: {}]
  %s3 = inlined_call_operand.vmem [shape: f32[8,2], index: 3, kind: output, shape index: {}]
  %s4 = sld [smem:[#allocation0]]
  $region22: #{tpu_custom_call.1} parent=0
    _
  %s6 = ssub.s32 1, %s4
  %s7 = scalar_select 0, %s6, %s4
  %8 = sst [smem:[#allocation2]] %s2
  // Predicated region
  $region2: #{tpu_custom_call.1} parent=0 // pred_check
    _
  $region3: #{tpu_custom_call.1} parent=0 // pred_check_branch
    %10 = sbr.rel (0) target = $region5
  $region4: #{tpu_custom_call.1} parent=0 // pred_region
    _
  $region5: #{tpu_custom_call.1} parent=0 // pred_fallthru
    _
  // Predicated region
  $region6: #{tpu_custom_call.1} parent=0 // pred_check
    _
  $region7: #{tpu_custom_call.1} parent=0 // pred_check_branch
    %12 = sbr.rel (0) target = $region9
  $region8: #{tpu_custom_call.1} parent=0 // pred_region
    _
  $region9: #{tpu_custom_call.1} parent=0 // pred_fallthru
    _
  // Predicated region
  $region10: #{tpu_custom_call.1} parent=0 // pred_check
    _
  $region11: #{tpu_custom_call.1} parent=0 // pred_check_branch
    %14 = sbr.rel (0) target = $region13
  $region12: #{tpu_custom_call.1} parent=0 // pred_region
    _
  $region13: #{tpu_custom_call.1} parent=0 // pred_fallthru
    _
  %v15 = vld [vmem:[%s0] sm:$0xff]
  %v16 = vld [vmem:[%s1] sm:$0xff]
  %v17 = vld [vmem:[%s1 + $0x8] sm:$0xff]
  %v18 = vld [vmem:[%s1 + $0x10] sm:$0xff]
  %v19 = vld [vmem:[%s1 + $0x18] sm:$0xff]
  %v20 = vld [vmem:[%s1 + $0x20] sm:$0xff]
  %v21 = vld [vmem:[%s1 + $0x28] sm:$0xff]
  %v22 = vld [vmem:[%s1 + $0x30] sm:$0xff]
  %v23 = vld [vmem:[%s1 + $0x38] sm:$0xff]
  %v24 = vld [vmem:[%s1 + $0x40] sm:$0xff]
  %v25 = vld [vmem:[%s1 + $0x48] sm:$0xff]
  %v26 = vld [vmem:[%s1 + $0x50] sm:$0xff]
  %v27 = vld [vmem:[%s1 + $0x58] sm:$0xff]
  %v28 = vld [vmem:[%s1 + $0x60] sm:$0xff]
  %v29 = vld [vmem:[%s1 + $0x68] sm:$0xff]
  %v30 = vld [vmem:[%s1 + $0x70] sm:$0xff]
  %v31 = vld [vmem:[%s1 + $0x78] sm:$0xff]
  %s32 = sld [smem:[#allocation2]]
  %v33 = vstv %s32
  %34 = vmatpush.msra.mxu0 %v31
  %35 = vmatpush.msra.mxu0 %v30
  %36 = vmatpush.msra.mxu0 %v29
  %37 = vmatpush.msra.mxu0 %v28
  %38 = vmatpush.msra.mxu0 %v27
  %39 = vmatpush.msra.mxu0 %v26
  %40 = vmatpush.msra.mxu0 %v25
  %41 = vmatpush.msra.mxu0 %v24
  %42 = vmatpush.msra.mxu0 %v23
  %43 = vmatpush.msra.mxu0 %v22
  %44 = vmatpush.msra.mxu0 %v21
  %45 = vmatpush.msra.mxu0 %v20
  %46 = vmatpush.msra.mxu0 %v19
  %47 = vmatpush.msra.mxu0 %v18
  %48 = vmatpush.msra.mxu0 %v17
  %49 = vmatpush.msra.mxu0 %v16
  %50 = vmatmul.f32.gmra.mxu0 %v15
  %v51 = vpop.f32.mrf.mxu0
  %v52 = vadd.f32 %v33, %v51
  %53 = vdwg.mxu0
  %v54 = vsub.f32 0.0, %v52
  %v55 = vmul.f32 %v54, 1.442695
  %v56 = vpow.pop %v55
  %v57 = vadd.f32 %v56, 1.0
  %v58 = vrcp.pop %v57
  %vm59 = vcmask 15360
  %60 = vst.msk [vmem:[%s3] sm:$0xff] %vm59, %v58
  // Predicated region
  $region14: #{tpu_custom_call.1} parent=0 // pred_check
    _
  $region15: #{tpu_custom_call.1} parent=0 // pred_check_branch
    %62 = sbr.rel (0) target = $region17
  $region16: #{tpu_custom_call.1} parent=0 // pred_region
    _
  $region17: #{tpu_custom_call.1} parent=0 // pred_fallthru
    _
  // Predicated region
  $region18: #{tpu_custom_call.1} parent=0 // pred_check
    _
  $region19: #{tpu_custom_call.1} parent=0 // pred_check_branch
    %64 = sbr.rel (0) target = $region21
  $region20: #{tpu_custom_call.1} parent=0 // pred_region
    _
  $region21: #{tpu_custom_call.1} parent=0 // pred_fallthru
    _

</llo_original>
